<compile_context>
chip_gen: v7x
topology: tpu7x:2x2x1
jax: 0.10.0
libtpu: 0.0.40
codegen_flags: <defaults>
</compile_context>

<pallas_src>
import functools

import jax
import jax.numpy as jnp
from jax.experimental import pallas as pl
from jax.experimental.pallas import tpu as pltpu

GAMMA = 2.0  # matches FocalLoss(gamma=2.0)
# weight=None in the reference module -> no per-class weighting.
# TODO(synk): if a per-class `weight` tensor is supplied, also gather
#             weight[target] inside the kernel and multiply.
# TODO(synk): for vocab-sized C (32k+), add a second 'arbitrary' grid axis over
#             C with online-softmax (running max/sum) accumulators so a row
#             block never needs the whole class axis resident in VMEM.


def _focal_loss_kernel(logits_ref, target_ref, out_ref, *, gamma):
    # logits_ref: (BN, C) float, target_ref: (BN, 1) int32, out_ref: (BN, 1) f32
    x = logits_ref[...].astype(jnp.float32)
    num_classes = x.shape[-1]

    # Numerically stable softmax statistics; the single C-wide EUP pass.
    m = jnp.max(x, axis=-1, keepdims=True)
    shifted = x - m
    e = jnp.exp(shifted)
    lse = jnp.log(jnp.sum(e, axis=-1, keepdims=True))  # O(1) EUP per row

    # Gather the target-class shifted logit per row (pure VPU mask + reduce).
    t = target_ref[...]  # (BN, 1) int32
    cls = jax.lax.broadcasted_iota(jnp.int32, x.shape, dimension=1)
    x_t = jnp.sum(jnp.where(cls == t, shifted, 0.0), axis=-1, keepdims=True)

    # Per-row focal loss: -(1 - p_t)^gamma * log(p_t).
    log_p_t = x_t - lse
    p_t = jnp.exp(log_p_t)  # O(1) EUP per row
    q = 1.0 - p_t
    g_int = int(gamma)
    if float(gamma) == float(g_int) and 0 <= g_int <= 8:
        focal = jnp.ones_like(q)
        for _ in range(g_int):  # unrolled multiply chain; no exp/log-based pow
            focal = focal * q
    else:
        focal = q ** gamma

    # Out-of-range targets contribute 0 (matches nll_loss ignore_index-style
    # behaviour of the previous one-hot formulation).
    valid = jnp.logical_and(t >= 0, t < num_classes)
    out_ref[...] = jnp.where(valid, -(focal * log_p_t), 0.0)


def focal_loss(logits, targets, *, gamma=GAMMA, block_n=None):
    """logits: (N, C) float; targets: (N,) int -> per-sample loss (N,) f32."""
    N, C = logits.shape
    itemsize = jnp.dtype(logits.dtype).itemsize

    if block_n is None:
        # ~1 MiB of logits per pipeline buffer (double-buffered => ~2 MiB),
        # rounded to a multiple of 8 sublanes. Small enough for v5e's 16 MiB
        # default scoped VMEM and v7x's 64 MiB physical VMEM, big enough to
        # sit near the HBM roofline.
        block_n = max(8, ((1 << 20) // max(1, C * itemsize)) // 8 * 8)
    block_n = max(8, (int(block_n) // 8) * 8)
    # Never use a block bigger than the (8-padded) row count.
    block_n = min(block_n, pl.cdiv(N, 8) * 8)

    n_pad = pl.cdiv(N, block_n) * block_n
    targets_i32 = targets.astype(jnp.int32)
    if n_pad != N:
        # Handle ragged N: pad, compute, slice the tail off afterwards.
        logits = jnp.pad(logits, ((0, n_pad - N), (0, 0)))
        targets_i32 = jnp.pad(targets_i32, (0, n_pad - N))
    targets2d = targets_i32.reshape(n_pad, 1)

    grid = (n_pad // block_n,)
    out = pl.pallas_call(
        functools.partial(_focal_loss_kernel, gamma=gamma),
        out_shape=jax.ShapeDtypeStruct((n_pad, 1), jnp.float32),
        grid_spec=pltpu.PrefetchScalarGridSpec(
            num_scalar_prefetch=0,
            grid=grid,
            in_specs=[
                pl.BlockSpec((block_n, C), lambda i: (i, 0)),
                pl.BlockSpec((block_n, 1), lambda i: (i, 0)),
            ],
            out_specs=pl.BlockSpec((block_n, 1), lambda i: (i, 0)),
        ),
        compiler_params=pltpu.CompilerParams(
            dimension_semantics=("parallel",),
            vmem_limit_bytes=64 << 20,
        ),
    )(logits, targets2d)
    return out[:N, 0]


def focal_loss_ref(logits, targets, gamma=GAMMA):
    # Pure-JAX reference matching the PyTorch module (reduction='none').
    log_prob = jax.nn.log_softmax(logits.astype(jnp.float32), axis=-1)
    prob = jnp.exp(log_prob)
    focal = (1.0 - prob) ** gamma * log_prob
    picked = jnp.take_along_axis(focal, targets[:, None].astype(jnp.int32), axis=-1)
    return -picked[:, 0]


if __name__ == "__main__":
    key = jax.random.PRNGKey(0)
    k1, k2, k3, k4 = jax.random.split(key, 4)

    # Case 1: small shapes, single block (8 samples, 16 classes).
    N1, C1 = 8, 16
    logits1 = jax.random.normal(k1, (N1, C1), dtype=jnp.float32)
    targets1 = jax.random.randint(k2, (N1,), 0, C1, dtype=jnp.int32)
    loss1 = jax.block_until_ready(focal_loss(logits1, targets1))
    ref1 = focal_loss_ref(logits1, targets1)
    assert loss1.shape == (N1,)
    assert jnp.allclose(loss1, ref1, atol=1e-5, rtol=1e-5), (loss1, ref1)

    # Case 2: ragged N with an explicit small block -> multi-step parallel grid
    # plus tail padding (20 samples padded to 24, grid=(3,)).
    N2, C2 = 20, 16
    logits2 = jax.random.normal(k3, (N2, C2), dtype=jnp.float32)
    targets2 = jax.random.randint(k4, (N2,), 0, C2, dtype=jnp.int32)
    loss2 = jax.block_until_ready(focal_loss(logits2, targets2, block_n=8))
    ref2 = focal_loss_ref(logits2, targets2)
    assert loss2.shape == (N2,)
    assert jnp.allclose(loss2, ref2, atol=1e-5, rtol=1e-5), (loss2, ref2)

    print("KERNEL_OK")
</pallas_src>

<mosaic_0001>
module attributes {stable_mosaic.version = 11 : i64} {
  func.func @_focal_loss_kernel(%arg0: i32, %arg1: memref<8x16xf32, #tpu.memory_space<vmem>>, %arg2: memref<8x1xi32, #tpu.memory_space<vmem>>, %arg3: memref<8x1xf32, #tpu.memory_space<vmem>>) attributes {dimension_semantics = [#tpu.dimension_semantics<parallel>], iteration_bounds = array<i64: 1>, scalar_prefetch = 0 : i64, scratch_operands = 0 : i64, tpu.core_type = #tpu.core_type<tc>, window_params = [{transform_indices = @transform_0, window_bounds = array<i64: 8, 16>}, {transform_indices = @transform_1, window_bounds = array<i64: 8, 1>}, {transform_indices = @transform_2, window_bounds = array<i64: 8, 1>}]} {
    %c0 = arith.constant 0 : index
    %c0_0 = arith.constant 0 : index
    %0 = vector.load %arg1[%c0, %c0_0] : memref<8x16xf32, #tpu.memory_space<vmem>>, vector<8x16xf32>
    %cst = arith.constant dense<0xFF800000> : vector<8xf32>
    %1 = vector.multi_reduction <maximumf>, %0, %cst [1] : vector<8x16xf32> to vector<8xf32>
    %2 = vector.shape_cast %1 : vector<8xf32> to vector<8x1xf32>
    %3 = vector.broadcast %2 : vector<8x1xf32> to vector<8x16xf32>
    %4 = arith.subf %0, %3 : vector<8x16xf32>
    %5 = math.exp %4 : vector<8x16xf32>
    %cst_1 = arith.constant dense<0.000000e+00> : vector<8xf32>
    %6 = vector.multi_reduction <add>, %5, %cst_1 [1] : vector<8x16xf32> to vector<8xf32>
    %7 = vector.shape_cast %6 : vector<8xf32> to vector<8x1xf32>
    %8 = math.log %7 : vector<8x1xf32>
    %c0_2 = arith.constant 0 : index
    %c0_3 = arith.constant 0 : index
    %9 = vector.load %arg2[%c0_2, %c0_3] : memref<8x1xi32, #tpu.memory_space<vmem>>, vector<8x1xi32>
    %10 = tpu.iota {dimensions = array<i32: 1>} : vector<8x16xi32>
    %11 = vector.broadcast %9 : vector<8x1xi32> to vector<8x16xi32>
    %12 = arith.cmpi eq, %10, %11 : vector<8x16xi32>
    %cst_4 = arith.constant 0.000000e+00 : f32
    %13 = vector.broadcast %cst_4 : f32 to vector<8x16xf32>
    %14 = arith.select %12, %4, %13 : vector<8x16xi1>, vector<8x16xf32>
    %cst_5 = arith.constant dense<0.000000e+00> : vector<8xf32>
    %15 = vector.multi_reduction <add>, %14, %cst_5 [1] : vector<8x16xf32> to vector<8xf32>
    %16 = vector.shape_cast %15 : vector<8xf32> to vector<8x1xf32>
    %17 = arith.subf %16, %8 : vector<8x1xf32>
    %18 = math.exp %17 : vector<8x1xf32>
    %cst_6 = arith.constant 1.000000e+00 : f32
    %19 = vector.broadcast %cst_6 : f32 to vector<8x1xf32>
    %20 = arith.subf %19, %18 : vector<8x1xf32>
    %cst_7 = arith.constant 1.000000e+00 : f32
    %21 = vector.broadcast %cst_7 : f32 to vector<8x1xf32>
    %22 = arith.mulf %21, %20 : vector<8x1xf32>
    %23 = arith.mulf %22, %20 : vector<8x1xf32>
    %c0_i32 = arith.constant 0 : i32
    %24 = vector.broadcast %c0_i32 : i32 to vector<8x1xi32>
    %25 = arith.cmpi sge, %9, %24 : vector<8x1xi32>
    %c16_i32 = arith.constant 16 : i32
    %26 = vector.broadcast %c16_i32 : i32 to vector<8x1xi32>
    %27 = arith.cmpi slt, %9, %26 : vector<8x1xi32>
    %28 = arith.andi %25, %27 : vector<8x1xi1>
    %29 = arith.mulf %23, %17 : vector<8x1xf32>
    %cst_8 = arith.constant 0.000000e+00 : f32
    %30 = vector.broadcast %cst_8 : f32 to vector<8x1xf32>
    %31 = arith.subf %30, %29 : vector<8x1xf32>
    %cst_9 = arith.constant 0.000000e+00 : f32
    %32 = vector.broadcast %cst_9 : f32 to vector<8x1xf32>
    %33 = arith.select %28, %31, %32 : vector<8x1xi1>, vector<8x1xf32>
    %c0_10 = arith.constant 0 : index
    %c0_11 = arith.constant 0 : index
    %34 = vector.load %arg3[%c0_10, %c0_11] : memref<8x1xf32, #tpu.memory_space<vmem>>, vector<8x1xf32>
    tpu.vector_store %arg3[%c0_10, %c0_11], %33 {strides = array<i32>} : memref<8x1xf32, #tpu.memory_space<vmem>>, vector<8x1xf32>,
    return
  }
  func.func @transform_0(%arg0: i32) -> (i32, i32) {
    %c0_i32 = arith.constant 0 : i32
    %c0_i32_0 = arith.constant 0 : i32
    return %arg0, %c0_i32 : i32, i32
  }
  func.func @transform_1(%arg0: i32) -> (i32, i32) {
    %c0_i32 = arith.constant 0 : i32
    %c0_i32_0 = arith.constant 0 : i32
    return %arg0, %c0_i32 : i32, i32
  }
  func.func @transform_2(%arg0: i32) -> (i32, i32) {
    %c0_i32 = arith.constant 0 : i32
    %c0_i32_0 = arith.constant 0 : i32
    return %arg0, %c0_i32 : i32, i32
  }
}

</mosaic_0001>

<llo_original>
// kernel: tpu_custom_call.1
$region0: #{tpu_custom_call.1}
  #allocation0 [shape = 'u32[]', space=smem, size = 0x4, offset = 0x4, fixed_abs, tag = 'smem constant byte address 0x4 - core index']
  #allocation1 [shape = 'u32[144,128]{1,0:T(1,128)}', space=vmem, size = 0x12000, scoped, tag = 'internal scratch']
  %s0 = inlined_call_operand.hbm [shape: f32[8,16], index: 0, kind: input, shape index: {}]
  %s1 = inlined_call_operand.hbm [shape: s32[8,1], index: 1, kind: input, shape index: {}]
  %s2 = inlined_call_operand.hbm [shape: f32[8,1], index: 2, kind: output, shape index: {}]
  %s3 = sld [smem:[#allocation0]]
  $region26: #{tpu_custom_call.1} parent=0
    _
  %s5 = ssub.s32 1, %s3
  %s6 = scalar_select 0, %s5, %s3
  $region1: #{tpu_custom_call.1} parent=0
    #allocation2 [shape = 'u8[4096]{0}', space=vmem, size = 0x1000, scoped, tag = 'input window, operand 0, single buffered']
    #allocation3 [shape = 's32[1]{0}', space=sflag, size = 0x4, scoped, tag = 'scoped memory for tpu_custom_call.1']
    #allocation4 [shape = 's32[1]{0}', space=sflag, size = 0x4, scoped, tag = 'scoped memory for tpu_custom_call.1']
    #allocation5 [shape = 'u8[4096]{0}', space=vmem, size = 0x1000, scoped, tag = 'input window, operand 1, single buffered']
    #allocation6 [shape = 's32[1]{0}', space=sflag, size = 0x4, scoped, tag = 'scoped memory for tpu_custom_call.1']
    #allocation7 [shape = 'u8[4096]{0}', space=vmem, size = 0x1000, scoped, tag = 'output window, operand 0, single buffered']
    %7 = vsyncpa [#allocation3], 0
    %8 = vsyncpa [#allocation6], 0
    %9 = vsyncpa [#allocation4], 0
    // Predicated region
    $region2: #{tpu_custom_call.1} parent=1 // pred_check
      _
    $region3: #{tpu_custom_call.1} parent=1 // pred_check_branch
      %11 = sbr.rel (0) target = $region5
    $region4: #{tpu_custom_call.1} parent=1 // pred_region
      %s13 = ssub.s32 128, 128
      %14 = vsyncadd [#allocation3], %s13
      %s16 = sshll.u32 [#allocation2], 4
      %s17 = int_to_ptr.vmem [resolvable:$true] %s16
      %19 = dma.hbm_to_vmem [thread:$0]  %s0, 128, %s17, [#allocation3]
    $region5: #{tpu_custom_call.1} parent=1 // pred_fallthru
      _
    // Predicated region
    $region6: #{tpu_custom_call.1} parent=1 // pred_check
      _
    $region7: #{tpu_custom_call.1} parent=1 // pred_check_branch
      %21 = sbr.rel (0) target = $region9
    $region8: #{tpu_custom_call.1} parent=1 // pred_region
      %s23 = ssub.s32 128, 128
      %24 = vsyncadd [#allocation6], %s23
      %s26 = sshll.u32 [#allocation5], 4
      %s27 = int_to_ptr.vmem [resolvable:$true] %s26
      %29 = dma.hbm_to_vmem [thread:$0]  %s1, 128, %s27, [#allocation6]
    $region9: #{tpu_custom_call.1} parent=1 // pred_fallthru
      _
    // Predicated region
    $region10: #{tpu_custom_call.1} parent=1 // pred_check
      _
    $region11: #{tpu_custom_call.1} parent=1 // pred_check_branch
      %31 = sbr.rel (0) target = $region13
    $region12: #{tpu_custom_call.1} parent=1 // pred_region
      %32 = dma.done [#allocation3], 128
    $region13: #{tpu_custom_call.1} parent=1 // pred_fallthru
      _
    // Predicated region
    $region14: #{tpu_custom_call.1} parent=1 // pred_check
      _
    $region15: #{tpu_custom_call.1} parent=1 // pred_check_branch
      %34 = sbr.rel (0) target = $region17
    $region16: #{tpu_custom_call.1} parent=1 // pred_region
      %35 = dma.done [#allocation6], 128
    $region17: #{tpu_custom_call.1} parent=1 // pred_fallthru
      _
    %v36 = vld [vmem:[#allocation2] sm:$0xff]
    %vm37 = vcmask 130048
    %v38 = vsel %vm37, %v36, -inf
    %39 = vmax.xlane.f32.xlu0 %v38
    %v40 = vpop.xlane.xlu0 %39
    %v41 = vsub.f32 %v36, %v40
    %v42 = vmul.f32 %v41, 1.442695
    %v43 = vpow.pop %v42
    %v44 = vsel %vm37, %v43, 0.0
    %45 = vadd.xlane.f32.xlu0 %v44
    %v46 = vpop.xlane.xlu0 %45
    %v47 = vlog2.pop %v46
    %v48 = vmul.f32 %v47, 0.6931472
    %v49 = vld [vmem:[#allocation5] sm:$0xff]
    %v50 = vlaneseq
    %v51 = vand.u32 %v50, 127
    %52 = vset.pattern.permute.xlu0 0
    %53 = vperm.xlu0 %52, %v49
    %v54 = vpop.permute.xlu0 %53
    %vm55 = vcmp.eq.s32.totalorder %v51, %v54
    %v56 = vsel %vm55, %v41, 0.0
    %v57 = vsel %vm37, %v56, 0.0
    %58 = vadd.xlane.f32.xlu0 %v57
    %v59 = vpop.xlane.xlu0 %58
    %v60 = vsub.f32 %v59, %v48
    %v61 = vmul.f32 %v60, 1.442695
    %v62 = vpow.pop %v61
    %v63 = vsub.f32 1.0, %v62
    %v64 = vmul.f32 %v63, %v63
    %vm65 = vcmp.ge.s32.totalorder %v49, 0
    %vm66 = vcmp.lt.s32.totalorder %v49, 16
    %vm67 = vmand %vm65, %vm66
    %v68 = vmul.f32 %v64, %v60
    %v69 = vsub.f32 0.0, %v68
    %v70 = vsel %vm67, %v69, 0.0
    %vm71 = vcmask 7168
    %72 = vst.msk [vmem:[#allocation7] sm:$0xff] %vm71, %v70
    // Predicated region
    $region18: #{tpu_custom_call.1} parent=1 // pred_check
      _
    $region19: #{tpu_custom_call.1} parent=1 // pred_check_branch
      %74 = sbr.rel (0) target = $region21
    $region20: #{tpu_custom_call.1} parent=1 // pred_region
      %s76 = ssub.s32 128, 128
      %77 = vsyncadd [#allocation4], %s76
      %s79 = sshll.u32 [#allocation7], 4
      %s80 = int_to_ptr.vmem [resolvable:$true] %s79
      %82 = dma.vmem_to_hbm [thread:$0]  %s80, 128, %s2, [#allocation4]
    $region21: #{tpu_custom_call.1} parent=1 // pred_fallthru
      _
    // Predicated region
    $region22: #{tpu_custom_call.1} parent=1 // pred_check
      _
    $region23: #{tpu_custom_call.1} parent=1 // pred_check_branch
      %84 = sbr.rel (0) target = $region25
    $region24: #{tpu_custom_call.1} parent=1 // pred_region
      %85 = dma.done [#allocation4], 128
    $region25: #{tpu_custom_call.1} parent=1 // pred_fallthru
      _
    %86 = vsyncpa [#allocation3], 1
    %87 = vsyncpa [#allocation6], 1
    %88 = vsyncpa [#allocation4], 1

</llo_original>
